<compile_context>
chip_gen: v6e
topology: v6e:2x2x1
jax: 0.10.0
libtpu: 0.0.40
codegen_flags: <defaults>
</compile_context>

<pallas_src>
import functools

import jax
import jax.numpy as jnp
from jax.experimental import pallas as pl
from jax.experimental.pallas import tpu as pltpu


def _round_up(x: int, m: int) -> int:
    return ((x + m - 1) // m) * m


# ---------------------------------------------------------------------------
# Fused Pallas kernel: num_layers x (matmul + bias [+ ReLU]) in one invocation.
# refs = (x_ref, w0, b0, w1, b1, ..., w_{L-1}, b_{L-1}, o_ref)
# ---------------------------------------------------------------------------
def _mlp_fused_kernel(*refs, num_layers: int):
    x_ref = refs[0]
    o_ref = refs[1 + 2 * num_layers]

    # Feed the MXU bf16 operands; accumulate in f32.
    h = x_ref[...].astype(jnp.bfloat16)
    y = None
    for l in range(num_layers):
        w_ref = refs[1 + 2 * l]   # bf16 (K_pad, N_pad), VMEM-resident across M tiles
        b_ref = refs[2 + 2 * l]   # f32  (1, N_pad)
        y = jnp.dot(h, w_ref[...], preferred_element_type=jnp.float32)
        y = y + b_ref[...]        # f32 epilogue (v5e has no bf16 VPU path)
        if l < num_layers - 1:
            h = jnp.maximum(y, 0.0).astype(jnp.bfloat16)
    o_ref[...] = y.astype(o_ref.dtype)


# ---------------------------------------------------------------------------
# Wrapper: padding, BlockSpecs, grid over M.
# ---------------------------------------------------------------------------
def mlp_forward(x, params, *, m_tile: int = 256):
    """x: (batch, seq, input_dim) f32; params: list of (W (in,out), b (out,))."""
    batch, seq, in_dim = x.shape
    num_layers = len(params)
    dims_in = [w.shape[0] for w, _ in params]
    dims_out = [w.shape[1] for w, _ in params]
    assert dims_in[0] == in_dim

    # Lane-dense padded feature dims (multiples of 128).
    k0_pad = _round_up(dims_in[0], 128)
    n_pad = [_round_up(n, 128) for n in dims_out]
    k_pad = [k0_pad] + n_pad[:-1]

    # Row (sublane) padding: multiple of 8 for f32; pick the largest M tile
    # (<= m_tile) so M_pad is an exact multiple of it.
    M = batch * seq
    m8 = _round_up(M, 8)
    m_blk = min(m_tile, m8)
    m_total = _round_up(M, m_blk)

    # Zero-pad inputs / params. Zero padding is exact: padded feature columns
    # stay 0 through bias(=0)+ReLU, and are sliced off at the end.
    x2d = x.reshape(M, in_dim)
    x_pad = jnp.zeros((m_total, k0_pad), x.dtype).at[:M, :in_dim].set(x2d)

    flat_wb = []
    for l, (w, b) in enumerate(params):
        w_pad = jnp.zeros((k_pad[l], n_pad[l]), jnp.bfloat16)
        w_pad = w_pad.at[: w.shape[0], : w.shape[1]].set(w.astype(jnp.bfloat16))
        b_pad = jnp.zeros((1, n_pad[l]), jnp.float32).at[0, : b.shape[0]].set(b)
        flat_wb += [w_pad, b_pad]

    # BlockSpecs: activations/output stream over the M grid; weights & biases
    # map to block (0, 0) every step -> loaded once, VMEM-resident.
    in_specs = [pl.BlockSpec((m_blk, k0_pad), lambda i: (i, 0))]
    for l in range(num_layers):
        in_specs.append(pl.BlockSpec((k_pad[l], n_pad[l]), lambda i: (0, 0)))
        in_specs.append(pl.BlockSpec((1, n_pad[l]), lambda i: (0, 0)))
    out_specs = pl.BlockSpec((m_blk, n_pad[-1]), lambda i: (i, 0))
    grid = (m_total // m_blk,)

    # Advisory cost estimate for XLA scheduling.
    flops = sum(2 * m_total * k_pad[l] * n_pad[l] for l in range(num_layers))
    bytes_accessed = (
        x_pad.size * 4
        + sum(a.size * a.dtype.itemsize for a in flat_wb)
        + m_total * n_pad[-1] * 4
    )
    cost = pl.CostEstimate(
        flops=flops, transcendentals=0, bytes_accessed=bytes_accessed
    )

    # VMEM footprint per grid step (x/out double-buffered, weights resident);
    # only raise the scoped limit if we actually need it (v7x has 64 MiB phys).
    vmem_need = (
        2 * m_blk * k0_pad * 4
        + 2 * m_blk * n_pad[-1] * 4
        + sum(2 * (k_pad[l] * n_pad[l] * 2 + n_pad[l] * 4) for l in range(num_layers))
        + m_blk * max(n_pad) * 4  # hidden activation
    )
    cp_kwargs = {"dimension_semantics": ("parallel",)}
    if vmem_need > (30 << 20):
        cp_kwargs["vmem_limit_bytes"] = min(int(vmem_need * 1.25) + (1 << 20), 100 << 20)

    kernel = functools.partial(_mlp_fused_kernel, num_layers=num_layers)
    out_pad = pl.pallas_call(
        kernel,
        out_shape=jax.ShapeDtypeStruct((m_total, n_pad[-1]), x.dtype),
        grid=grid,
        in_specs=in_specs,
        out_specs=out_specs,
        compiler_params=pltpu.CompilerParams(**cp_kwargs),
        cost_estimate=cost,
    )(x_pad, *flat_wb)

    return out_pad[:M, : dims_out[-1]].reshape(batch, seq, dims_out[-1])


# ---------------------------------------------------------------------------
# Parameter init mimicking nn.Linear defaults (uniform +/- 1/sqrt(fan_in)).
# ---------------------------------------------------------------------------
def init_mlp_params(key, input_dim, hidden_dim, output_dim, num_layers):
    h = [hidden_dim] * (num_layers - 1)
    dims_in = [input_dim] + h
    dims_out = h + [output_dim]
    params = []
    for n_in, n_out in zip(dims_in, dims_out):
        key, kw, kb = jax.random.split(key, 3)
        bound = 1.0 / (n_in ** 0.5)
        w = jax.random.uniform(kw, (n_in, n_out), jnp.float32, -bound, bound)
        b = jax.random.uniform(kb, (n_out,), jnp.float32, -bound, bound)
        params.append((w, b))
    return params


# ---------------------------------------------------------------------------
# Reference (pure jnp) with matching bf16 matmul / f32 accumulate numerics.
# ---------------------------------------------------------------------------
def mlp_reference(x, params):
    h = x
    n = len(params)
    for i, (w, b) in enumerate(params):
        y = jnp.dot(
            h.astype(jnp.bfloat16),
            w.astype(jnp.bfloat16),
            preferred_element_type=jnp.float32,
        ) + b
        h = jnp.maximum(y, 0.0) if i < n - 1 else y
    return h


if __name__ == "__main__":
    key = jax.random.PRNGKey(0)
    k_x, k_p = jax.random.split(key)

    # Small shapes consistent with MLP usage inside a DETR head:
    # (batch, num_queries, embed_dim) -> MLP(input_dim, hidden_dim, output_dim, 3)
    batch, seq = 2, 8
    input_dim, hidden_dim, output_dim, num_layers = 32, 32, 16, 3

    x = jax.random.normal(k_x, (batch, seq, input_dim), jnp.float32)
    params = init_mlp_params(k_p, input_dim, hidden_dim, output_dim, num_layers)

    out = mlp_forward(x, params)
    out = jax.block_until_ready(out)

    ref = mlp_reference(x, params)
    assert out.shape == (batch, seq, output_dim), out.shape
    assert jnp.allclose(out, ref, atol=2e-3, rtol=2e-3), "mismatch vs reference"

    print("KERNEL_OK")
</pallas_src>

<mosaic_0001>
module attributes {stable_mosaic.version = 11 : i64} {
  func.func @_mlp_fused_kernel(%arg0: i32, %arg1: memref<16x128xf32, #tpu.memory_space<vmem>>, %arg2: memref<128x128xbf16, #tpu.memory_space<vmem>>, %arg3: memref<1x128xf32, #tpu.memory_space<vmem>>, %arg4: memref<128x128xbf16, #tpu.memory_space<vmem>>, %arg5: memref<1x128xf32, #tpu.memory_space<vmem>>, %arg6: memref<128x128xbf16, #tpu.memory_space<vmem>>, %arg7: memref<1x128xf32, #tpu.memory_space<vmem>>, %arg8: memref<16x128xf32, #tpu.memory_space<vmem>>) attributes {dimension_semantics = [#tpu.dimension_semantics<parallel>], iteration_bounds = array<i64: 1>, scalar_prefetch = 0 : i64, scratch_operands = 0 : i64, tpu.core_type = #tpu.core_type<tc>, window_params = [{transform_indices = @transform_0, window_bounds = array<i64: 16, 128>}, {pipeline_mode = #tpu.pipeline_mode<synchronous>, transform_indices = @transform_1, window_bounds = array<i64: 128, 128>}, {pipeline_mode = #tpu.pipeline_mode<synchronous>, transform_indices = @transform_2, window_bounds = array<i64: 1, 128>}, {pipeline_mode = #tpu.pipeline_mode<synchronous>, transform_indices = @transform_3, window_bounds = array<i64: 128, 128>}, {pipeline_mode = #tpu.pipeline_mode<synchronous>, transform_indices = @transform_4, window_bounds = array<i64: 1, 128>}, {pipeline_mode = #tpu.pipeline_mode<synchronous>, transform_indices = @transform_5, window_bounds = array<i64: 128, 128>}, {pipeline_mode = #tpu.pipeline_mode<synchronous>, transform_indices = @transform_6, window_bounds = array<i64: 1, 128>}, {transform_indices = @transform_7, window_bounds = array<i64: 16, 128>}]} {
    %c0 = arith.constant 0 : index
    %c0_0 = arith.constant 0 : index
    %0 = vector.load %arg1[%c0, %c0_0] : memref<16x128xf32, #tpu.memory_space<vmem>>, vector<16x128xf32>
    %1 = arith.truncf %0 : vector<16x128xf32> to vector<16x128xbf16>
    %c0_1 = arith.constant 0 : index
    %c0_2 = arith.constant 0 : index
    %2 = vector.load %arg2[%c0_1, %c0_2] : memref<128x128xbf16, #tpu.memory_space<vmem>>, vector<128x128xbf16>
    %cst = arith.constant dense<0.000000e+00> : vector<16x128xf32>
    %3 = tpu.matmul %1, %2, %cst {dimension_numbers = #tpu.dot_dimension_numbers<[1], [0], [0], [1], [0, 0, 1, 1], [], []>} : vector<16x128xbf16>, vector<128x128xbf16>, vector<16x128xf32> -> vector<16x128xf32>
    %c0_3 = arith.constant 0 : index
    %c0_4 = arith.constant 0 : index
    %4 = vector.load %arg3[%c0_3, %c0_4] : memref<1x128xf32, #tpu.memory_space<vmem>>, vector<1x128xf32>
    %5 = vector.broadcast %4 : vector<1x128xf32> to vector<16x128xf32>
    %6 = arith.addf %3, %5 : vector<16x128xf32>
    %cst_5 = arith.constant 0.000000e+00 : f32
    %7 = vector.broadcast %cst_5 : f32 to vector<16x128xf32>
    %8 = arith.maximumf %6, %7 : vector<16x128xf32>
    %9 = arith.truncf %8 : vector<16x128xf32> to vector<16x128xbf16>
    %c0_6 = arith.constant 0 : index
    %c0_7 = arith.constant 0 : index
    %10 = vector.load %arg4[%c0_6, %c0_7] : memref<128x128xbf16, #tpu.memory_space<vmem>>, vector<128x128xbf16>
    %cst_8 = arith.constant dense<0.000000e+00> : vector<16x128xf32>
    %11 = tpu.matmul %9, %10, %cst_8 {dimension_numbers = #tpu.dot_dimension_numbers<[1], [0], [0], [1], [0, 0, 1, 1], [], []>} : vector<16x128xbf16>, vector<128x128xbf16>, vector<16x128xf32> -> vector<16x128xf32>
    %c0_9 = arith.constant 0 : index
    %c0_10 = arith.constant 0 : index
    %12 = vector.load %arg5[%c0_9, %c0_10] : memref<1x128xf32, #tpu.memory_space<vmem>>, vector<1x128xf32>
    %13 = vector.broadcast %12 : vector<1x128xf32> to vector<16x128xf32>
    %14 = arith.addf %11, %13 : vector<16x128xf32>
    %cst_11 = arith.constant 0.000000e+00 : f32
    %15 = vector.broadcast %cst_11 : f32 to vector<16x128xf32>
    %16 = arith.maximumf %14, %15 : vector<16x128xf32>
    %17 = arith.truncf %16 : vector<16x128xf32> to vector<16x128xbf16>
    %c0_12 = arith.constant 0 : index
    %c0_13 = arith.constant 0 : index
    %18 = vector.load %arg6[%c0_12, %c0_13] : memref<128x128xbf16, #tpu.memory_space<vmem>>, vector<128x128xbf16>
    %cst_14 = arith.constant dense<0.000000e+00> : vector<16x128xf32>
    %19 = tpu.matmul %17, %18, %cst_14 {dimension_numbers = #tpu.dot_dimension_numbers<[1], [0], [0], [1], [0, 0, 1, 1], [], []>} : vector<16x128xbf16>, vector<128x128xbf16>, vector<16x128xf32> -> vector<16x128xf32>
    %c0_15 = arith.constant 0 : index
    %c0_16 = arith.constant 0 : index
    %20 = vector.load %arg7[%c0_15, %c0_16] : memref<1x128xf32, #tpu.memory_space<vmem>>, vector<1x128xf32>
    %21 = vector.broadcast %20 : vector<1x128xf32> to vector<16x128xf32>
    %22 = arith.addf %19, %21 : vector<16x128xf32>
    %c0_17 = arith.constant 0 : index
    %c0_18 = arith.constant 0 : index
    %23 = vector.load %arg8[%c0_17, %c0_18] : memref<16x128xf32, #tpu.memory_space<vmem>>, vector<16x128xf32>
    tpu.vector_store %arg8[%c0_17, %c0_18], %22 {strides = array<i32>} : memref<16x128xf32, #tpu.memory_space<vmem>>, vector<16x128xf32>,
    return
  }
  func.func @transform_0(%arg0: i32) -> (i32, i32) {
    %c0_i32 = arith.constant 0 : i32
    %c0_i32_0 = arith.constant 0 : i32
    return %arg0, %c0_i32 : i32, i32
  }
  func.func @transform_1(%arg0: i32) -> (i32, i32) {
    %c0_i32 = arith.constant 0 : i32
    %c0_i32_0 = arith.constant 0 : i32
    %c0_i32_1 = arith.constant 0 : i32
    return %c0_i32, %c0_i32_0 : i32, i32
  }
  func.func @transform_2(%arg0: i32) -> (i32, i32) {
    %c0_i32 = arith.constant 0 : i32
    %c0_i32_0 = arith.constant 0 : i32
    %c0_i32_1 = arith.constant 0 : i32
    return %c0_i32, %c0_i32_0 : i32, i32
  }
  func.func @transform_3(%arg0: i32) -> (i32, i32) {
    %c0_i32 = arith.constant 0 : i32
    %c0_i32_0 = arith.constant 0 : i32
    %c0_i32_1 = arith.constant 0 : i32
    return %c0_i32, %c0_i32_0 : i32, i32
  }
  func.func @transform_4(%arg0: i32) -> (i32, i32) {
    %c0_i32 = arith.constant 0 : i32
    %c0_i32_0 = arith.constant 0 : i32
    %c0_i32_1 = arith.constant 0 : i32
    return %c0_i32, %c0_i32_0 : i32, i32
  }
  func.func @transform_5(%arg0: i32) -> (i32, i32) {
    %c0_i32 = arith.constant 0 : i32
    %c0_i32_0 = arith.constant 0 : i32
    %c0_i32_1 = arith.constant 0 : i32
    return %c0_i32, %c0_i32_0 : i32, i32
  }
  func.func @transform_6(%arg0: i32) -> (i32, i32) {
    %c0_i32 = arith.constant 0 : i32
    %c0_i32_0 = arith.constant 0 : i32
    %c0_i32_1 = arith.constant 0 : i32
    return %c0_i32, %c0_i32_0 : i32, i32
  }
  func.func @transform_7(%arg0: i32) -> (i32, i32) {
    %c0_i32 = arith.constant 0 : i32
    %c0_i32_0 = arith.constant 0 : i32
    return %arg0, %c0_i32 : i32, i32
  }
}

</mosaic_0001>

<llo_original>
// kernel: tpu_custom_call.1
$region0: #{tpu_custom_call.1}
  #allocation0 [shape = 'u32[]', space=smem, size = 0x4, offset = 0x4, fixed_abs, tag = 'smem constant byte address 0x4 - core index']
  #allocation1 [shape = 'u32[144,128]{1,0:T(1,128)}', space=vmem, size = 0x12000, scoped, tag = 'internal scratch']
  %s0 = inlined_call_operand.hbm [shape: f32[16,128], index: 0, kind: input, shape index: {}]
  %s1 = inlined_call_operand.hbm [shape: bf16[128,128], index: 1, kind: input, shape index: {}]
  %s2 = inlined_call_operand.vmem [shape: f32[1,128], index: 2, kind: input, shape index: {}]
  %s3 = inlined_call_operand.hbm [shape: bf16[128,128], index: 3, kind: input, shape index: {}]
  %s4 = inlined_call_operand.vmem [shape: f32[1,128], index: 4, kind: input, shape index: {}]
  %s5 = inlined_call_operand.hbm [shape: bf16[128,128], index: 5, kind: input, shape index: {}]
  %s6 = inlined_call_operand.vmem [shape: f32[1,128], index: 6, kind: input, shape index: {}]
  %s7 = inlined_call_operand.hbm [shape: f32[16,128], index: 7, kind: output, shape index: {}]
  %s8 = sld [smem:[#allocation0]]
  $region54: #{tpu_custom_call.1} parent=0
    _
  %s10 = ssub.s32 1, %s8
  %s11 = scalar_select 0, %s10, %s8
  $region1: #{tpu_custom_call.1} parent=0
    #allocation2 [shape = 'u8[8192]{0}', space=vmem, size = 0x2000, scoped, tag = 'input window, operand 0, single buffered']
    #allocation3 [shape = 's32[1]{0}', space=sflag, size = 0x4, scoped, tag = 'scoped memory for tpu_custom_call.1']
    #allocation4 [shape = 's32[1]{0}', space=sflag, size = 0x4, scoped, tag = 'scoped memory for tpu_custom_call.1']
    #allocation5 [shape = 'u8[32768]{0}', space=vmem, size = 0x8000, scoped, tag = 'input window, operand 1, single buffered']
    #allocation6 [shape = 's32[1]{0}', space=sflag, size = 0x4, scoped, tag = 'scoped memory for tpu_custom_call.1']
    #allocation7 [shape = 'u8[32768]{0}', space=vmem, size = 0x8000, scoped, tag = 'input window, operand 3, single buffered']
    #allocation8 [shape = 'u8[32768]{0}', space=vmem, size = 0x8000, scoped, tag = 'input window, operand 5, single buffered']
    #allocation9 [shape = 's32[1]{0}', space=sflag, size = 0x4, scoped, tag = 'scoped memory for tpu_custom_call.1']
    #allocation10 [shape = 'u8[8192]{0}', space=vmem, size = 0x2000, scoped, tag = 'output window, operand 0, single buffered']
    %12 = vsyncpa [#allocation3], 0
    %13 = vsyncpa [#allocation6], 0
    %14 = vsyncpa [#allocation9], 0
    %15 = vsyncpa [#allocation4], 0
    // Predicated region
    $region2: #{tpu_custom_call.1} parent=1 // pred_check
      _
    $region3: #{tpu_custom_call.1} parent=1 // pred_check_branch
      %17 = sbr.rel (0) target = $region5
    $region4: #{tpu_custom_call.1} parent=1 // pred_region
      %s19 = ssub.s32 256, 256
      %20 = vsyncadd [#allocation3], %s19
      %s21 = sshll.u32 [#allocation2], 4
      %s22 = int_to_ptr.vmem [resolvable:$true] %s21
      %27 = dma.hbm_to_vmem [thread:$0]  %s0, 256, %s22, [#allocation3], 128, 128, 8
    $region5: #{tpu_custom_call.1} parent=1 // pred_fallthru
      _
    // Predicated region
    $region6: #{tpu_custom_call.1} parent=1 // pred_check
      _
    $region7: #{tpu_custom_call.1} parent=1 // pred_check_branch
      %29 = sbr.rel (0) target = $region9
    $region8: #{tpu_custom_call.1} parent=1 // pred_region
      %s31 = ssub.s32 1024, 1024
      %32 = vsyncadd [#allocation6], %s31
      %s33 = sshll.u32 [#allocation5], 4
      %s34 = int_to_ptr.vmem [resolvable:$true] %s33
      %39 = dma.hbm_to_vmem [thread:$0]  %s1, 1024, %s34, [#allocation6], 64, 64, 4
    $region9: #{tpu_custom_call.1} parent=1 // pred_fallthru
      _
    // Predicated region
    $region10: #{tpu_custom_call.1} parent=1 // pred_check
      _
    $region11: #{tpu_custom_call.1} parent=1 // pred_check_branch
      %41 = sbr.rel (0) target = $region13
    $region12: #{tpu_custom_call.1} parent=1 // pred_region
      _
    $region13: #{tpu_custom_call.1} parent=1 // pred_fallthru
      _
    // Predicated region
    $region14: #{tpu_custom_call.1} parent=1 // pred_check
      _
    $region15: #{tpu_custom_call.1} parent=1 // pred_check_branch
      %43 = sbr.rel (0) target = $region17
    $region16: #{tpu_custom_call.1} parent=1 // pred_region
      %s45 = ssub.s32 1024, 1024
      %46 = vsyncadd [#allocation6], %s45
      %s47 = sshll.u32 [#allocation7], 4
      %s48 = int_to_ptr.vmem [resolvable:$true] %s47
      %53 = dma.hbm_to_vmem [thread:$0]  %s3, 1024, %s48, [#allocation6], 64, 64, 4
    $region17: #{tpu_custom_call.1} parent=1 // pred_fallthru
      _
    // Predicated region
    $region18: #{tpu_custom_call.1} parent=1 // pred_check
      _
    $region19: #{tpu_custom_call.1} parent=1 // pred_check_branch
      %55 = sbr.rel (0) target = $region21
    $region20: #{tpu_custom_call.1} parent=1 // pred_region
      _
    $region21: #{tpu_custom_call.1} parent=1 // pred_fallthru
      _
    // Predicated region
    $region22: #{tpu_custom_call.1} parent=1 // pred_check
      _
    $region23: #{tpu_custom_call.1} parent=1 // pred_check_branch
      %57 = sbr.rel (0) target = $region25
    $region24: #{tpu_custom_call.1} parent=1 // pred_region
      %s59 = ssub.s32 1024, 1024
      %60 = vsyncadd [#allocation9], %s59
      %s61 = sshll.u32 [#allocation8], 4
      %s62 = int_to_ptr.vmem [resolvable:$true] %s61
      %67 = dma.hbm_to_vmem [thread:$0]  %s5, 1024, %s62, [#allocation9], 64, 64, 4
    $region25: #{tpu_custom_call.1} parent=1 // pred_fallthru
      _
    // Predicated region
    $region26: #{tpu_custom_call.1} parent=1 // pred_check
      _
    $region27: #{tpu_custom_call.1} parent=1 // pred_check_branch
      %69 = sbr.rel (0) target = $region29
    $region28: #{tpu_custom_call.1} parent=1 // pred_region
      _
    $region29: #{tpu_custom_call.1} parent=1 // pred_fallthru
      _
    // Predicated region
    $region30: #{tpu_custom_call.1} parent=1 // pred_check
      _
    $region31: #{tpu_custom_call.1} parent=1 // pred_check_branch
      %71 = sbr.rel (0) target = $region33
    $region32: #{tpu_custom_call.1} parent=1 // pred_region
      %72 = dma.done [#allocation3], 256
    $region33: #{tpu_custom_call.1} parent=1 // pred_fallthru
      _
    // Predicated region
    $region34: #{tpu_custom_call.1} parent=1 // pred_check
      _
    $region35: #{tpu_custom_call.1} parent=1 // pred_check_branch
      %74 = sbr.rel (0) target = $region37
    $region36: #{tpu_custom_call.1} parent=1 // pred_region
      %75 = dma.done [#allocation6], 1024
    $region37: #{tpu_custom_call.1} parent=1 // pred_fallthru
      _
    // Predicated region
    $region38: #{tpu_custom_call.1} parent=1 // pred_check
      _
    $region39: #{tpu_custom_call.1} parent=1 // pred_check_branch
      %77 = sbr.rel (0) target = $region41
    $region40: #{tpu_custom_call.1} parent=1 // pred_region
      %78 = dma.done [#allocation6], 1024
    $region41: #{tpu_custom_call.1} parent=1 // pred_fallthru
      _
    // Predicated region
    $region42: #{tpu_custom_call.1} parent=1 // pred_check
      _
    $region43: #{tpu_custom_call.1} parent=1 // pred_check_branch
      %80 = sbr.rel (0) target = $region45
    $region44: #{tpu_custom_call.1} parent=1 // pred_region
      %81 = dma.done [#allocation9], 1024
    $region45: #{tpu_custom_call.1} parent=1 // pred_fallthru
      _
    %v83 = vld [vmem:[#allocation2] sm:$0xff]
    %v84 = vld [vmem:[#allocation2 + $0x8] sm:$0xff]
    %v85 = vpack.c.bf16 %v84, %v83
    %v86 = vld [vmem:[#allocation5] sm:$0xf]
    %v87 = vld [vmem:[#allocation5 + $0x4] sm:$0xf]
    %v88 = vld [vmem:[#allocation5 + $0x8] sm:$0xf]
    %v89 = vld [vmem:[#allocation5 + $0xc] sm:$0xf]
    %v90 = vld [vmem:[#allocation5 + $0x10] sm:$0xf]
    %v91 = vld [vmem:[#allocation5 + $0x14] sm:$0xf]
    %v92 = vld [vmem:[#allocation5 + $0x18] sm:$0xf]
    %v93 = vld [vmem:[#allocation5 + $0x1c] sm:$0xf]
    %v94 = vld [vmem:[#allocation5 + $0x20] sm:$0xf]
    %v95 = vld [vmem:[#allocation5 + $0x24] sm:$0xf]
    %v96 = vld [vmem:[#allocation5 + $0x28] sm:$0xf]
    %v97 = vld [vmem:[#allocation5 + $0x2c] sm:$0xf]
    %v98 = vld [vmem:[#allocation5 + $0x30] sm:$0xf]
    %v99 = vld [vmem:[#allocation5 + $0x34] sm:$0xf]
    %v100 = vld [vmem:[#allocation5 + $0x38] sm:$0xf]
    %v101 = vld [vmem:[#allocation5 + $0x3c] sm:$0xf]
    %v102 = vld [vmem:[%s2] sm:$0x1]
    %v104 = vlaneseq
    %v105 = vshrl.u32 %v104, 7
    %v106 = vsub.s32 0, %v105
    %v107 = vrot.slane %v102, %v106
    %v125 = vunpack.c.l.b16 %v86
    %v126 = vunpack.c.l.b16 %v87
    %v127 = vunpack.c.l.b16 %v88
    %v128 = vunpack.c.l.b16 %v89
    %v129 = vunpack.c.l.b16 %v90
    %v130 = vunpack.c.l.b16 %v91
    %v131 = vunpack.c.l.b16 %v92
    %v132 = vunpack.c.l.b16 %v93
    %v133 = vunpack.c.l.b16 %v94
    %v134 = vunpack.c.l.b16 %v95
    %v135 = vunpack.c.l.b16 %v96
    %v136 = vunpack.c.l.b16 %v97
    %v137 = vunpack.c.l.b16 %v98
    %v138 = vunpack.c.l.b16 %v99
    %v139 = vunpack.c.l.b16 %v100
    %v140 = vunpack.c.l.b16 %v101
    %v141 = vpack.c.b16 %v126, %v125
    %v142 = vpack.c.b16 %v128, %v127
    %v143 = vpack.c.b16 %v130, %v129
    %v144 = vpack.c.b16 %v132, %v131
    %v145 = vpack.c.b16 %v134, %v133
    %v146 = vpack.c.b16 %v136, %v135
    %v147 = vpack.c.b16 %v138, %v137
    %v148 = vpack.c.b16 %v140, %v139
    %157 = vmatprep.subr.bf16.mxu0 0
    %158 = vmatpush1.bf16.msra.mxu0 %v148
    %159 = vmatprep.subr.bf16.mxu0 0
    %160 = vmatpush1.bf16.msra.mxu0 %v147
    %161 = vmatprep.subr.bf16.mxu0 0
    %162 = vmatpush1.bf16.msra.mxu0 %v146
    %163 = vmatprep.subr.bf16.mxu0 0
    %164 = vmatpush1.bf16.msra.mxu0 %v145
    %165 = vmatprep.subr.bf16.mxu0 0
    %166 = vmatpush1.bf16.msra.mxu0 %v144
    %167 = vmatprep.subr.bf16.mxu0 0
    %168 = vmatpush1.bf16.msra.mxu0 %v143
    %169 = vmatprep.subr.bf16.mxu0 0
    %170 = vmatpush1.bf16.msra.mxu0 %v142
    %171 = vmatprep.subr.bf16.mxu0 0
    %172 = vmatpush1.bf16.msra.mxu0 %v141
    %173 = vmatprep.subr.bf16.mxu0 0
    %174 = vmatpush2.bf16.msra.mxu0 0
    %175 = vmatprep.subr.bf16.mxu0 0
    %176 = vmatpush2.bf16.msra.mxu0 0
    %177 = vmatprep.subr.bf16.mxu0 0
    %178 = vmatpush2.bf16.msra.mxu0 0
    %179 = vmatprep.subr.bf16.mxu0 0
    %180 = vmatpush2.bf16.msra.mxu0 0
    %181 = vmatprep.subr.bf16.mxu0 0
    %182 = vmatpush2.bf16.msra.mxu0 0
    %183 = vmatprep.subr.bf16.mxu0 0
    %184 = vmatpush2.bf16.msra.mxu0 0
    %185 = vmatprep.subr.bf16.mxu0 0
    %186 = vmatpush2.bf16.msra.mxu0 0
    %187 = vmatprep.subr.bf16.mxu0 0
    %188 = vmatpush2.bf16.msra.mxu0 0
    %189 = vmatprep.mubr.bf16.mxu0 0
    %190 = vmatmul.mubr.bf16.gmra.mxu0 %v85
    %v191 = vpop.f32.mrf.mxu0
    %v192 = vadd.f32 %v107, %v191
    %v193 = vpop.f32.mrf.mxu0
    %v194 = vpop.f32.mrf.mxu0
    %v195 = vadd.f32 %v107, %v194
    %v196 = vpop.f32.mrf.mxu0
    %197 = vdwg.mxu0
    %v198 = vmax.f32 %v192, 0.0
    %v199 = vmax.f32 %v195, 0.0
    %v200 = vpack.c.bf16 %v199, %v198
    %v201 = vld [vmem:[#allocation7] sm:$0xf]
    %v202 = vld [vmem:[#allocation7 + $0x4] sm:$0xf]
    %v203 = vld [vmem:[#allocation7 + $0x8] sm:$0xf]
    %v204 = vld [vmem:[#allocation7 + $0xc] sm:$0xf]
    %v205 = vld [vmem:[#allocation7 + $0x10] sm:$0xf]
    %v206 = vld [vmem:[#allocation7 + $0x14] sm:$0xf]
    %v207 = vld [vmem:[#allocation7 + $0x18] sm:$0xf]
    %v208 = vld [vmem:[#allocation7 + $0x1c] sm:$0xf]
    %v209 = vld [vmem:[#allocation7 + $0x20] sm:$0xf]
    %v210 = vld [vmem:[#allocation7 + $0x24] sm:$0xf]
    %v211 = vld [vmem:[#allocation7 + $0x28] sm:$0xf]
    %v212 = vld [vmem:[#allocation7 + $0x2c] sm:$0xf]
    %v213 = vld [vmem:[#allocation7 + $0x30] sm:$0xf]
    %v214 = vld [vmem:[#allocation7 + $0x34] sm:$0xf]
    %v215 = vld [vmem:[#allocation7 + $0x38] sm:$0xf]
    %v216 = vld [vmem:[#allocation7 + $0x3c] sm:$0xf]
    %v217 = vld [vmem:[%s4] sm:$0x1]
    %v219 = vlaneseq
    %v220 = vshrl.u32 %v219, 7
    %v221 = vsub.s32 0, %v220
    %v222 = vrot.slane %v217, %v221
    %v240 = vunpack.c.l.b16 %v201
    %v241 = vunpack.c.l.b16 %v202
    %v242 = vunpack.c.l.b16 %v203
    %v243 = vunpack.c.l.b16 %v204
    %v244 = vunpack.c.l.b16 %v205
    %v245 = vunpack.c.l.b16 %v206
    %v246 = vunpack.c.l.b16 %v207
    %v247 = vunpack.c.l.b16 %v208
    %v248 = vunpack.c.l.b16 %v209
    %v249 = vunpack.c.l.b16 %v210
    %v250 = vunpack.c.l.b16 %v211
    %v251 = vunpack.c.l.b16 %v212
    %v252 = vunpack.c.l.b16 %v213
    %v253 = vunpack.c.l.b16 %v214
    %v254 = vunpack.c.l.b16 %v215
    %v255 = vunpack.c.l.b16 %v216
    %v256 = vpack.c.b16 %v241, %v240
    %v257 = vpack.c.b16 %v243, %v242
    %v258 = vpack.c.b16 %v245, %v244
    %v259 = vpack.c.b16 %v247, %v246
    %v260 = vpack.c.b16 %v249, %v248
    %v261 = vpack.c.b16 %v251, %v250
    %v262 = vpack.c.b16 %v253, %v252
    %v263 = vpack.c.b16 %v255, %v254
    %272 = vmatprep.subr.bf16.mxu0 0
    %273 = vmatpush1.bf16.msra.mxu0 %v263
    %274 = vmatprep.subr.bf16.mxu0 0
    %275 = vmatpush1.bf16.msra.mxu0 %v262
    %276 = vmatprep.subr.bf16.mxu0 0
    %277 = vmatpush1.bf16.msra.mxu0 %v261
    %278 = vmatprep.subr.bf16.mxu0 0
    %279 = vmatpush1.bf16.msra.mxu0 %v260
    %280 = vmatprep.subr.bf16.mxu0 0
    %281 = vmatpush1.bf16.msra.mxu0 %v259
    %282 = vmatprep.subr.bf16.mxu0 0
    %283 = vmatpush1.bf16.msra.mxu0 %v258
    %284 = vmatprep.subr.bf16.mxu0 0
    %285 = vmatpush1.bf16.msra.mxu0 %v257
    %286 = vmatprep.subr.bf16.mxu0 0
    %287 = vmatpush1.bf16.msra.mxu0 %v256
    %288 = vmatprep.subr.bf16.mxu0 0
    %289 = vmatpush2.bf16.msra.mxu0 0
    %290 = vmatprep.subr.bf16.mxu0 0
    %291 = vmatpush2.bf16.msra.mxu0 0
    %292 = vmatprep.subr.bf16.mxu0 0
    %293 = vmatpush2.bf16.msra.mxu0 0
    %294 = vmatprep.subr.bf16.mxu0 0
    %295 = vmatpush2.bf16.msra.mxu0 0
    %296 = vmatprep.subr.bf16.mxu0 0
    %297 = vmatpush2.bf16.msra.mxu0 0
    %298 = vmatprep.subr.bf16.mxu0 0
    %299 = vmatpush2.bf16.msra.mxu0 0
    %300 = vmatprep.subr.bf16.mxu0 0
    %301 = vmatpush2.bf16.msra.mxu0 0
    %302 = vmatprep.subr.bf16.mxu0 0
    %303 = vmatpush2.bf16.msra.mxu0 0
    %304 = vmatprep.mubr.bf16.mxu0 0
    %305 = vmatmul.mubr.bf16.gmra.mxu0 %v200
    %v306 = vpop.f32.mrf.mxu0
    %v307 = vadd.f32 %v222, %v306
    %v308 = vpop.f32.mrf.mxu0
    %v309 = vpop.f32.mrf.mxu0
    %v310 = vadd.f32 %v222, %v309
    %v311 = vpop.f32.mrf.mxu0
    %312 = vdwg.mxu0
    %v313 = vmax.f32 %v307, 0.0
    %v314 = vmax.f32 %v310, 0.0
    %v315 = vpack.c.bf16 %v314, %v313
    %v316 = vld [vmem:[#allocation8] sm:$0xf]
    %v317 = vld [vmem:[#allocation8 + $0x4] sm:$0xf]
    %v318 = vld [vmem:[#allocation8 + $0x8] sm:$0xf]
    %v319 = vld [vmem:[#allocation8 + $0xc] sm:$0xf]
    %v320 = vld [vmem:[#allocation8 + $0x10] sm:$0xf]
    %v321 = vld [vmem:[#allocation8 + $0x14] sm:$0xf]
    %v322 = vld [vmem:[#allocation8 + $0x18] sm:$0xf]
    %v323 = vld [vmem:[#allocation8 + $0x1c] sm:$0xf]
    %v324 = vld [vmem:[#allocation8 + $0x20] sm:$0xf]
    %v325 = vld [vmem:[#allocation8 + $0x24] sm:$0xf]
    %v326 = vld [vmem:[#allocation8 + $0x28] sm:$0xf]
    %v327 = vld [vmem:[#allocation8 + $0x2c] sm:$0xf]
    %v328 = vld [vmem:[#allocation8 + $0x30] sm:$0xf]
    %v329 = vld [vmem:[#allocation8 + $0x34] sm:$0xf]
    %v330 = vld [vmem:[#allocation8 + $0x38] sm:$0xf]
    %v331 = vld [vmem:[#allocation8 + $0x3c] sm:$0xf]
    %v332 = vld [vmem:[%s6] sm:$0x1]
    %v334 = vlaneseq
    %v335 = vshrl.u32 %v334, 7
    %v336 = vsub.s32 0, %v335
    %v337 = vrot.slane %v332, %v336
    %v355 = vunpack.c.l.b16 %v316
    %v356 = vunpack.c.l.b16 %v317
    %v357 = vunpack.c.l.b16 %v318
    %v358 = vunpack.c.l.b16 %v319
    %v359 = vunpack.c.l.b16 %v320
    %v360 = vunpack.c.l.b16 %v321
    %v361 = vunpack.c.l.b16 %v322
    %v362 = vunpack.c.l.b16 %v323
    %v363 = vunpack.c.l.b16 %v324
    %v364 = vunpack.c.l.b16 %v325
    %v365 = vunpack.c.l.b16 %v326
    %v366 = vunpack.c.l.b16 %v327
    %v367 = vunpack.c.l.b16 %v328
    %v368 = vunpack.c.l.b16 %v329
    %v369 = vunpack.c.l.b16 %v330
    %v370 = vunpack.c.l.b16 %v331
    %v371 = vpack.c.b16 %v356, %v355
    %v372 = vpack.c.b16 %v358, %v357
    %v373 = vpack.c.b16 %v360, %v359
    %v374 = vpack.c.b16 %v362, %v361
    %v375 = vpack.c.b16 %v364, %v363
    %v376 = vpack.c.b16 %v366, %v365
    %v377 = vpack.c.b16 %v368, %v367
    %v378 = vpack.c.b16 %v370, %v369
    %387 = vmatprep.subr.bf16.mxu0 0
    %388 = vmatpush1.bf16.msra.mxu0 %v378
    %389 = vmatprep.subr.bf16.mxu0 0
    %390 = vmatpush1.bf16.msra.mxu0 %v377
    %391 = vmatprep.subr.bf16.mxu0 0
    %392 = vmatpush1.bf16.msra.mxu0 %v376
    %393 = vmatprep.subr.bf16.mxu0 0
    %394 = vmatpush1.bf16.msra.mxu0 %v375
    %395 = vmatprep.subr.bf16.mxu0 0
    %396 = vmatpush1.bf16.msra.mxu0 %v374
    %397 = vmatprep.subr.bf16.mxu0 0
    %398 = vmatpush1.bf16.msra.mxu0 %v373
    %399 = vmatprep.subr.bf16.mxu0 0
    %400 = vmatpush1.bf16.msra.mxu0 %v372
    %401 = vmatprep.subr.bf16.mxu0 0
    %402 = vmatpush1.bf16.msra.mxu0 %v371
    %403 = vmatprep.subr.bf16.mxu0 0
    %404 = vmatpush2.bf16.msra.mxu0 0
    %405 = vmatprep.subr.bf16.mxu0 0
    %406 = vmatpush2.bf16.msra.mxu0 0
    %407 = vmatprep.subr.bf16.mxu0 0
    %408 = vmatpush2.bf16.msra.mxu0 0
    %409 = vmatprep.subr.bf16.mxu0 0
    %410 = vmatpush2.bf16.msra.mxu0 0
    %411 = vmatprep.subr.bf16.mxu0 0
    %412 = vmatpush2.bf16.msra.mxu0 0
    %413 = vmatprep.subr.bf16.mxu0 0
    %414 = vmatpush2.bf16.msra.mxu0 0
    %415 = vmatprep.subr.bf16.mxu0 0
    %416 = vmatpush2.bf16.msra.mxu0 0
    %417 = vmatprep.subr.bf16.mxu0 0
    %418 = vmatpush2.bf16.msra.mxu0 0
    %419 = vmatprep.mubr.bf16.mxu0 0
    %420 = vmatmul.mubr.bf16.gmra.mxu0 %v315
    %v421 = vpop.f32.mrf.mxu0
    %v422 = vadd.f32 %v337, %v421
    %v423 = vpop.f32.mrf.mxu0
    %v424 = vpop.f32.mrf.mxu0
    %v425 = vadd.f32 %v337, %v424
    %v426 = vpop.f32.mrf.mxu0
    %427 = vdwg.mxu0
    %428 = vst [vmem:[#allocation10] sm:$0xff] %v422
    %429 = vst [vmem:[#allocation10 + $0x8] sm:$0xff] %v425
    // Predicated region
    $region46: #{tpu_custom_call.1} parent=1 // pred_check
      _
    $region47: #{tpu_custom_call.1} parent=1 // pred_check_branch
      %431 = sbr.rel (0) target = $region49
    $region48: #{tpu_custom_call.1} parent=1 // pred_region
      %s433 = ssub.s32 256, 256
      %434 = vsyncadd [#allocation4], %s433
      %s435 = sshll.u32 [#allocation10], 4
      %s436 = int_to_ptr.vmem [resolvable:$true] %s435
      %441 = dma.vmem_to_hbm [thread:$0]  %s436, 256, %s7, [#allocation4], 128, 128, 8
    $region49: #{tpu_custom_call.1} parent=1 // pred_fallthru
      _
    // Predicated region
    $region50: #{tpu_custom_call.1} parent=1 // pred_check
      _
    $region51: #{tpu_custom_call.1} parent=1 // pred_check_branch
      %443 = sbr.rel (0) target = $region53
    $region52: #{tpu_custom_call.1} parent=1 // pred_region
      %444 = dma.done [#allocation4], 256
    $region53: #{tpu_custom_call.1} parent=1 // pred_fallthru
      _
    %445 = vsyncpa [#allocation3], 1
    %446 = vsyncpa [#allocation6], 1
    %447 = vsyncpa [#allocation9], 1
    %448 = vsyncpa [#allocation4], 1

</llo_original>
